<compile_context>
chip_gen: v7x
topology: tpu7x:2x2x1
jax: 0.10.0
libtpu: 0.0.40
codegen_flags: <defaults>
</compile_context>

<pallas_src>
import functools

import jax
import jax.numpy as jnp
from jax.experimental import pallas as pl
from jax.experimental.pallas import tpu as pltpu


_LANE = 128      # lane (last-dim) granularity
_SUB = 16        # sublane granularity used for bf16 row tiles
_BN_EPS = 1e-5   # nn.BatchNorm1d default


def _round_up(a, b):
    return (a + b - 1) // b * b


def _cdiv(a, b):
    return (a + b - 1) // b


# ----------------------------- Pallas kernels ------------------------------ #

def _accumulate(A_ref, xw_ref, B_ref, ew_ref, acc_ref,
                *, kA_tiles, kB_tiles, k_tiles):
    """acc += A_tile @ (x W_nx)_tile + B_tile @ (e W_ne)_tile  (f32 accumulation).

    The reduction axis is shared between the node (N) and edge (E) streams; tiles past
    an operand's valid range are skipped (no MXU pass) and their index_map is clamped
    so no new DMA is issued for them.
    """
    k = pl.program_id(1)

    @pl.when(k == 0)
    def _():
        acc_ref[...] = jnp.zeros_like(acc_ref)

    def _dot_nodes():
        acc_ref[...] += jnp.dot(A_ref[...], xw_ref[...],
                                preferred_element_type=jnp.float32)

    def _dot_edges():
        acc_ref[...] += jnp.dot(B_ref[...], ew_ref[...],
                                preferred_element_type=jnp.float32)

    if kA_tiles == k_tiles:
        _dot_nodes()
    else:
        pl.when(k < kA_tiles)(_dot_nodes)

    if kB_tiles == k_tiles:
        _dot_edges()
    else:
        pl.when(k < kB_tiles)(_dot_edges)


def _epilogue_pre_activation(acc_ref, inv_ref, x_root_ref, wr_ref, b_ref):
    """Mean-normalize the aggregated sums, add the resident root transform + bias."""
    root = jnp.dot(x_root_ref[...], wr_ref[...], preferred_element_type=jnp.float32)
    return acc_ref[...] * inv_ref[...] + root + b_ref[...]


def _sage_relu_bn_kernel(x_root_ref, A_ref, xw_ref, B_ref, ew_ref, inv_ref,
                         wr_ref, b_ref, s_ref, t_ref, o_ref, acc_ref,
                         *, kA_tiles, kB_tiles, k_tiles):
    """conv1 + ReLU + dropout(eval=identity) + folded BatchNorm1d (eval)."""
    _accumulate(A_ref, xw_ref, B_ref, ew_ref, acc_ref,
                kA_tiles=kA_tiles, kB_tiles=kB_tiles, k_tiles=k_tiles)

    @pl.when(pl.program_id(1) == k_tiles - 1)
    def _():
        z = _epilogue_pre_activation(acc_ref, inv_ref, x_root_ref, wr_ref, b_ref)
        z = jnp.maximum(z, 0.0)                                   # ReLU
        # dropout(p=0.5, training=False) == identity; BN(eval) folded to scale/shift.
        o_ref[...] = (z * s_ref[...] + t_ref[...]).astype(o_ref.dtype)


def _sage_log_softmax_kernel(x_root_ref, A_ref, xw_ref, B_ref, ew_ref, inv_ref,
                             wr_ref, b_ref, o_ref, acc_ref,
                             *, kA_tiles, kB_tiles, k_tiles, n_classes):
    """conv2 + log_softmax over the true class lanes (pad lanes masked)."""
    _accumulate(A_ref, xw_ref, B_ref, ew_ref, acc_ref,
                kA_tiles=kA_tiles, kB_tiles=kB_tiles, k_tiles=k_tiles)

    @pl.when(pl.program_id(1) == k_tiles - 1)
    def _():
        z = _epilogue_pre_activation(acc_ref, inv_ref, x_root_ref, wr_ref, b_ref)
        lane = jax.lax.broadcasted_iota(jnp.int32, z.shape, 1)
        valid = lane < n_classes
        zm = jnp.where(valid, z, jnp.float32(-1e30))              # mask pad lanes
        m = jnp.max(zm, axis=1, keepdims=True)
        p = jnp.exp(zm - m)                                       # pad lanes -> 0
        lse = jnp.log(jnp.sum(p, axis=1, keepdims=True))
        o_ref[...] = jnp.where(valid, z - m - lse, 0.0).astype(o_ref.dtype)


# ------------------------------ Host wrappers ------------------------------ #

def build_agg_mats(edge_index, num_src_nodes, res_size):
    """Dense 0/1 count operators + target in-degree (plain-JAX glue).

    A[t, s] = #edges s->t, B[t, e] = 1 iff edge e targets t, deg[t] = #incoming edges.
    Counts are exactly representable in bf16, so the kernel accumulates exact sums in
    f32 and applies 1/deg in the epilogue (no bf16-rounded 1/deg entries).
    # TODO(synk): replace with a sparse scalar-prefetch gather for non-toy graphs:
    #   dense A/B streaming is O(res*N) HBM bytes of mostly zeros.
    """
    src, dst = edge_index[0], edge_index[1]
    n_edges = edge_index.shape[1]
    A = jnp.zeros((res_size, num_src_nodes), jnp.float32).at[dst, src].add(1.0)
    B = jnp.zeros((res_size, n_edges), jnp.float32).at[dst, jnp.arange(n_edges)].add(1.0)
    deg = jnp.maximum(B.sum(axis=1, keepdims=True), 1.0)
    return A, B, deg


def _vmem_limit_bytes():
    """Generation-aware scoped-VMEM limit (~48 MiB on v7x, up to 96 MiB on v5e/v6e)."""
    try:
        cap = int(getattr(pltpu.get_tpu_info(), "vmem_capacity_bytes",
                          128 * 1024 * 1024))
    except Exception:
        cap = 128 * 1024 * 1024
    return max(32 * 1024 * 1024, min(cap * 3 // 4, 96 * 1024 * 1024))


def _row_tile(res_size):
    """Row tile: bf16 sublane-aligned; >= 2 tiles for medium graphs so v7x's second
    TensorCore gets work, 256-row tiles for large graphs (fills the 256-wide MXU)."""
    res_al = _round_up(max(res_size, 1), _SUB)
    if res_al <= _SUB:
        return _SUB
    if res_al <= 512:
        return _round_up(_cdiv(res_al, 2), _SUB)
    return 256


def sage_conv_pallas(x, edge_index, edge_attr, res_size,
                     w_root, w_nbr_x, w_nbr_e, bias,
                     *, mode, bn_params=None, tk=1024, out_dtype=jnp.float32):
    """One SAGEConvWithEdges layer (+ its fused epilogue) as a single pallas_call.

    Neighbor transforms are reassociated into the reduction loop: the host precomputes
    xW = x @ W_nbr_x and eW = e @ W_nbr_e, and the kernel accumulates A@xW + B@eW into
    a single (tm, h_pad) f32 accumulator.  The root transform runs once per row tile
    in the epilogue from resident x_root / W_root blocks.
    """
    n_src, fin = x.shape
    n_edges = edge_attr.shape[0]
    h_out = w_root.shape[1]

    fin_pad = _round_up(fin, _LANE)
    h_pad = _round_up(h_out, _LANE)

    tm = _row_tile(res_size)
    row_tiles = _cdiv(max(res_size, 1), tm)
    res_pad = row_tiles * tm

    # Reduction tile: large (default 1024) for big graphs, shrunk to the data for toys.
    tk = max(_LANE, _round_up(min(tk, _round_up(max(n_src, n_edges, 1), _LANE)), _LANE))
    kA_tiles = max(_cdiv(n_src, tk), 1)
    kB_tiles = max(_cdiv(n_edges, tk), 1)
    k_tiles = max(kA_tiles, kB_tiles)

    bf16 = jnp.bfloat16
    xb = x.astype(bf16)

    # Reassociated neighbor transforms (tiny host-side bf16 matmuls, f32 accumulation).
    xw = jnp.dot(xb, w_nbr_x.astype(bf16),
                 preferred_element_type=jnp.float32).astype(bf16)
    ew = jnp.dot(edge_attr.astype(bf16), w_nbr_e.astype(bf16),
                 preferred_element_type=jnp.float32).astype(bf16)

    A, B, deg = build_agg_mats(edge_index, n_src, res_size)

    A_p = (jnp.zeros((res_pad, kA_tiles * tk), jnp.float32)
           .at[:res_size, :n_src].set(A).astype(bf16))
    B_p = (jnp.zeros((res_pad, kB_tiles * tk), jnp.float32)
           .at[:res_size, :n_edges].set(B).astype(bf16))
    # TODO(synk): xw/ew could be streamed with their true (unpadded) last dim to save
    #   HBM bytes at scale; kept lane-padded so accumulator writes stay full-lane.
    xw_p = jnp.zeros((kA_tiles * tk, h_pad), bf16).at[:n_src, :h_out].set(xw)
    ew_p = jnp.zeros((kB_tiles * tk, h_pad), bf16).at[:n_edges, :h_out].set(ew)

    inv_p = jnp.zeros((res_pad, 1), jnp.float32).at[:res_size].set(1.0 / deg)
    xr_p = jnp.zeros((res_pad, fin_pad), bf16).at[:res_size, :fin].set(xb[:res_size])
    wr_p = jnp.zeros((fin_pad, h_pad), bf16).at[:fin, :h_out].set(w_root.astype(bf16))
    b_p = jnp.zeros((1, h_pad), jnp.float32).at[:, :h_out].set(
        jnp.asarray(bias, jnp.float32).reshape(1, -1))

    # Index maps.  Clamped maps revisit the last valid tile (no new DMA) for k beyond
    # an operand's range; the matching compute is skipped with pl.when in the kernel.
    def _col_map(n_valid):                 # A / B tiles: (row, k) blocks
        if n_valid >= k_tiles:
            return lambda i, k: (i, k)
        last = n_valid - 1
        return lambda i, k: (i, jnp.minimum(k, last))

    def _row_map(n_valid):                 # xW / eW tiles: (k, 0) blocks
        if n_valid >= k_tiles:
            return lambda i, k: (k, 0)
        last = n_valid - 1
        return lambda i, k: (jnp.minimum(k, last), 0)

    row_const = lambda i, k: (i, 0)
    const = lambda i, k: (0, 0)

    in_arrays = [xr_p, A_p, xw_p, B_p, ew_p, inv_p, wr_p, b_p]
    in_specs = [
        pl.BlockSpec((tm, fin_pad), row_const),          # x_root rows (resident over k)
        pl.BlockSpec((tm, tk), _col_map(kA_tiles)),      # A counts tile
        pl.BlockSpec((tk, h_pad), _row_map(kA_tiles)),   # (x @ W_nbr_x) tile
        pl.BlockSpec((tm, tk), _col_map(kB_tiles)),      # B counts tile
        pl.BlockSpec((tk, h_pad), _row_map(kB_tiles)),   # (e @ W_nbr_e) tile
        pl.BlockSpec((tm, 1), row_const),                # 1/deg per target row
        pl.BlockSpec((fin_pad, h_pad), const),           # W_root (resident)
        pl.BlockSpec((1, h_pad), const),                 # bias
    ]

    if mode == "relu_bn":
        gamma, beta, rmean, rvar = bn_params
        s = (jnp.asarray(gamma, jnp.float32).reshape(1, -1)
             * jax.lax.rsqrt(jnp.asarray(rvar, jnp.float32).reshape(1, -1) + _BN_EPS))
        t = (jnp.asarray(beta, jnp.float32).reshape(1, -1)
             - jnp.asarray(rmean, jnp.float32).reshape(1, -1) * s)
        s_p = jnp.zeros((1, h_pad), jnp.float32).at[:, :h_out].set(s)
        t_p = jnp.zeros((1, h_pad), jnp.float32).at[:, :h_out].set(t)
        in_arrays += [s_p, t_p]
        in_specs += [pl.BlockSpec((1, h_pad), const), pl.BlockSpec((1, h_pad), const)]
        kernel = functools.partial(_sage_relu_bn_kernel, kA_tiles=kA_tiles,
                                   kB_tiles=kB_tiles, k_tiles=k_tiles)
        transcendentals = 0
    elif mode == "log_softmax":
        kernel = functools.partial(_sage_log_softmax_kernel, kA_tiles=kA_tiles,
                                   kB_tiles=kB_tiles, k_tiles=k_tiles,
                                   n_classes=h_out)
        transcendentals = res_pad * (h_pad + 1)
    else:
        raise ValueError(mode)

    flops = 2 * res_pad * h_pad * (kA_tiles * tk + kB_tiles * tk + fin_pad)
    bytes_accessed = (sum(int(a.size) * a.dtype.itemsize for a in in_arrays)
                      + res_pad * h_pad * jnp.dtype(out_dtype).itemsize)

    out = pl.pallas_call(
        kernel,
        grid=(row_tiles, k_tiles),
        in_specs=in_specs,
        out_specs=pl.BlockSpec((tm, h_pad), row_const),
        out_shape=jax.ShapeDtypeStruct((res_pad, h_pad), out_dtype),
        scratch_shapes=[pltpu.VMEM((tm, h_pad), jnp.float32)],
        compiler_params=pltpu.CompilerParams(
            dimension_semantics=("parallel", "arbitrary"),
            vmem_limit_bytes=_vmem_limit_bytes()),
        cost_estimate=pl.CostEstimate(flops=flops,
                                      transcendentals=transcendentals,
                                      bytes_accessed=bytes_accessed),
    )(*in_arrays)

    return out[:res_size, :h_out]


def sagenet_with_edges_forward(x, blocks, params):
    """Full SAGENetWithEdges forward (eval mode).  Hidden activation hand-off in bf16."""
    (ei0, ea0, res0), (ei1, ea1, res1) = blocks
    h = sage_conv_pallas(
        x, ei0, ea0, res0,
        params["w_root1"], params["w_nx1"], params["w_ne1"], params["b1"],
        mode="relu_bn",
        bn_params=(params["bn_gamma"], params["bn_beta"],
                   params["bn_rmean"], params["bn_rvar"]),
        out_dtype=jnp.bfloat16)
    out = sage_conv_pallas(
        h, ei1, ea1, res1,
        params["w_root2"], params["w_nx2"], params["w_ne2"], params["b2"],
        mode="log_softmax",
        out_dtype=jnp.float32)
    return out


# --------------------------- Reference (pure JAX) --------------------------- #

def _ref_forward(x, blocks, params):
    """Semantically direct reference; mirrors the kernel's bf16-at-MXU numerics."""
    bf16 = jnp.bfloat16

    def conv(x_in, ei, ea, res, wr, wx, we, b):
        A, B, deg = build_agg_mats(ei, x_in.shape[0], res)
        xb = x_in.astype(bf16)
        xw = jnp.dot(xb, wx.astype(bf16), preferred_element_type=jnp.float32).astype(bf16)
        ew = jnp.dot(ea.astype(bf16), we.astype(bf16),
                     preferred_element_type=jnp.float32).astype(bf16)
        agg = (jnp.dot(A.astype(bf16), xw, preferred_element_type=jnp.float32)
               + jnp.dot(B.astype(bf16), ew, preferred_element_type=jnp.float32))
        root = jnp.dot(xb[:res], wr.astype(bf16), preferred_element_type=jnp.float32)
        return agg * (1.0 / deg) + root + b

    (ei0, ea0, res0), (ei1, ea1, res1) = blocks
    h = conv(x, ei0, ea0, res0,
             params["w_root1"], params["w_nx1"], params["w_ne1"], params["b1"])
    h = jnp.maximum(h, 0.0)
    s = params["bn_gamma"] * jax.lax.rsqrt(params["bn_rvar"] + _BN_EPS)
    t = params["bn_beta"] - params["bn_rmean"] * s
    h = (h * s + t).astype(bf16)            # layer-1 kernel output dtype
    o = conv(h, ei1, ea1, res1,
             params["w_root2"], params["w_nx2"], params["w_ne2"], params["b2"])
    return jax.nn.log_softmax(o, axis=1)


# ---------------------------------- Main ----------------------------------- #

if __name__ == "__main__":
    n_node_ftrs, n_edge_ftrs, n_classes, n_hidden = 16, 8, 6, 32
    N0, res0, E0 = 12, 8, 24      # block 0: 12 source nodes -> 8 target nodes
    res1, E1 = 4, 12              # block 1: res0 source nodes -> 4 target nodes

    key = jax.random.PRNGKey(0)
    ks = jax.random.split(key, 16)

    x = jax.random.normal(ks[0], (N0, n_node_ftrs), jnp.float32)

    ei0 = jnp.stack([jax.random.randint(ks[1], (E0,), 0, N0),
                     jax.random.randint(ks[2], (E0,), 0, res0)])
    ea0 = jax.random.normal(ks[3], (E0, n_edge_ftrs), jnp.float32)
    ei1 = jnp.stack([jax.random.randint(ks[4], (E1,), 0, res0),
                     jax.random.randint(ks[5], (E1,), 0, res1)])
    ea1 = jax.random.normal(ks[6], (E1, n_edge_ftrs), jnp.float32)

    def init_lin(k, fan_in, fan_out):
        bound = 1.0 / jnp.sqrt(fan_in)
        return jax.random.uniform(k, (fan_in, fan_out), jnp.float32, -bound, bound)

    params = {
        # conv1
        "w_root1": init_lin(ks[7], n_node_ftrs, n_hidden),
        "w_nx1":   init_lin(ks[8], n_node_ftrs, n_hidden),
        "w_ne1":   init_lin(ks[9], n_edge_ftrs, n_hidden),
        "b1":      jnp.zeros((1, n_hidden), jnp.float32),
        # BatchNorm1d(n_hidden) as initialized by PyTorch (eval mode)
        "bn_gamma": jnp.ones((1, n_hidden), jnp.float32),
        "bn_beta":  jnp.zeros((1, n_hidden), jnp.float32),
        "bn_rmean": jnp.zeros((1, n_hidden), jnp.float32),
        "bn_rvar":  jnp.ones((1, n_hidden), jnp.float32),
        # conv2
        "w_root2": init_lin(ks[10], n_hidden, n_classes),
        "w_nx2":   init_lin(ks[11], n_hidden, n_classes),
        "w_ne2":   init_lin(ks[12], n_edge_ftrs, n_classes),
        "b2":      jnp.zeros((1, n_classes), jnp.float32),
    }

    blocks = ((ei0, ea0, res0), (ei1, ea1, res1))

    out = sagenet_with_edges_forward(x, blocks, params)
    out = jax.block_until_ready(out)

    ref = _ref_forward(x, blocks, params)
    assert out.shape == (res1, n_classes)
    # bf16 MXU inputs + bf16 hidden hand-off give small (<~few e-3) deviations vs the
    # mirrored reference; 1e-2 is comfortably tight for bugs.
    assert jnp.allclose(out, ref, atol=1e-2, rtol=1e-2), "mismatch vs. JAX reference"
    assert bool(jnp.all(jnp.isfinite(out)))

    print("KERNEL_OK")
</pallas_src>

<mosaic_0001>
module attributes {stable_mosaic.version = 11 : i64} {
  func.func @_sage_relu_bn_kernel(%arg0: i32, %arg1: i32, %arg2: memref<16x128xbf16, #tpu.memory_space<vmem>>, %arg3: memref<16x128xbf16, #tpu.memory_space<vmem>>, %arg4: memref<128x128xbf16, #tpu.memory_space<vmem>>, %arg5: memref<16x128xbf16, #tpu.memory_space<vmem>>, %arg6: memref<128x128xbf16, #tpu.memory_space<vmem>>, %arg7: memref<16x1xf32, #tpu.memory_space<vmem>>, %arg8: memref<128x128xbf16, #tpu.memory_space<vmem>>, %arg9: memref<1x128xf32, #tpu.memory_space<vmem>>, %arg10: memref<1x128xf32, #tpu.memory_space<vmem>>, %arg11: memref<1x128xf32, #tpu.memory_space<vmem>>, %arg12: memref<16x128xbf16, #tpu.memory_space<vmem>>, %arg13: memref<16x128xf32, #tpu.memory_space<vmem>>) attributes {dimension_semantics = [#tpu.dimension_semantics<parallel>, #tpu.dimension_semantics<arbitrary>], iteration_bounds = array<i64: 1, 1>, scalar_prefetch = 0 : i64, scratch_operands = 1 : i64, tpu.core_type = #tpu.core_type<tc>, window_params = [{transform_indices = @transform_0, window_bounds = array<i64: 16, 128>}, {transform_indices = @transform_1, window_bounds = array<i64: 16, 128>}, {transform_indices = @transform_2, window_bounds = array<i64: 128, 128>}, {transform_indices = @transform_3, window_bounds = array<i64: 16, 128>}, {transform_indices = @transform_4, window_bounds = array<i64: 128, 128>}, {transform_indices = @transform_5, window_bounds = array<i64: 16, 1>}, {pipeline_mode = #tpu.pipeline_mode<synchronous>, transform_indices = @transform_6, window_bounds = array<i64: 128, 128>}, {pipeline_mode = #tpu.pipeline_mode<synchronous>, transform_indices = @transform_7, window_bounds = array<i64: 1, 128>}, {pipeline_mode = #tpu.pipeline_mode<synchronous>, transform_indices = @transform_8, window_bounds = array<i64: 1, 128>}, {pipeline_mode = #tpu.pipeline_mode<synchronous>, transform_indices = @transform_9, window_bounds = array<i64: 1, 128>}, {transform_indices = @transform_10, window_bounds = array<i64: 16, 128>}]} {
    %c0_i32 = arith.constant 0 : i32
    %0 = arith.cmpi eq, %arg1, %c0_i32 : i32
    %1 = arith.extui %0 : i1 to i32
    %c0_i32_0 = arith.constant 0 : i32
    %2 = arith.cmpi ne, %1, %c0_i32_0 : i32
    scf.if %2 {
      %cst_19 = arith.constant 0.000000e+00 : f32
      %18 = vector.broadcast %cst_19 : f32 to vector<16x128xf32>
      %c0_20 = arith.constant 0 : index
      %c0_21 = arith.constant 0 : index
      %19 = vector.load %arg13[%c0_20, %c0_21] : memref<16x128xf32, #tpu.memory_space<vmem>>, vector<16x128xf32>
      tpu.vector_store %arg13[%c0_20, %c0_21], %18 {strides = array<i32>} : memref<16x128xf32, #tpu.memory_space<vmem>>, vector<16x128xf32>,
    } else {
    }
    %c0 = arith.constant 0 : index
    %c0_1 = arith.constant 0 : index
    %3 = vector.load %arg13[%c0, %c0_1] : memref<16x128xf32, #tpu.memory_space<vmem>>, vector<16x128xf32>
    %c0_2 = arith.constant 0 : index
    %c0_3 = arith.constant 0 : index
    %4 = vector.load %arg3[%c0_2, %c0_3] : memref<16x128xbf16, #tpu.memory_space<vmem>>, vector<16x128xbf16>
    %c0_4 = arith.constant 0 : index
    %c0_5 = arith.constant 0 : index
    %5 = vector.load %arg4[%c0_4, %c0_5] : memref<128x128xbf16, #tpu.memory_space<vmem>>, vector<128x128xbf16>
    %cst = arith.constant dense<0.000000e+00> : vector<16x128xf32>
    %6 = tpu.matmul %4, %5, %cst {dimension_numbers = #tpu.dot_dimension_numbers<[1], [0], [0], [1], [0, 0, 1, 1], [], []>} : vector<16x128xbf16>, vector<128x128xbf16>, vector<16x128xf32> -> vector<16x128xf32>
    %7 = arith.addf %3, %6 : vector<16x128xf32>
    %c0_6 = arith.constant 0 : index
    %c0_7 = arith.constant 0 : index
    %8 = vector.load %arg13[%c0_6, %c0_7] : memref<16x128xf32, #tpu.memory_space<vmem>>, vector<16x128xf32>
    tpu.vector_store %arg13[%c0_6, %c0_7], %7 {strides = array<i32>} : memref<16x128xf32, #tpu.memory_space<vmem>>, vector<16x128xf32>,
    %c0_8 = arith.constant 0 : index
    %c0_9 = arith.constant 0 : index
    %9 = vector.load %arg13[%c0_8, %c0_9] : memref<16x128xf32, #tpu.memory_space<vmem>>, vector<16x128xf32>
    %c0_10 = arith.constant 0 : index
    %c0_11 = arith.constant 0 : index
    %10 = vector.load %arg5[%c0_10, %c0_11] : memref<16x128xbf16, #tpu.memory_space<vmem>>, vector<16x128xbf16>
    %c0_12 = arith.constant 0 : index
    %c0_13 = arith.constant 0 : index
    %11 = vector.load %arg6[%c0_12, %c0_13] : memref<128x128xbf16, #tpu.memory_space<vmem>>, vector<128x128xbf16>
    %cst_14 = arith.constant dense<0.000000e+00> : vector<16x128xf32>
    %12 = tpu.matmul %10, %11, %cst_14 {dimension_numbers = #tpu.dot_dimension_numbers<[1], [0], [0], [1], [0, 0, 1, 1], [], []>} : vector<16x128xbf16>, vector<128x128xbf16>, vector<16x128xf32> -> vector<16x128xf32>
    %13 = arith.addf %9, %12 : vector<16x128xf32>
    %c0_15 = arith.constant 0 : index
    %c0_16 = arith.constant 0 : index
    %14 = vector.load %arg13[%c0_15, %c0_16] : memref<16x128xf32, #tpu.memory_space<vmem>>, vector<16x128xf32>
    tpu.vector_store %arg13[%c0_15, %c0_16], %13 {strides = array<i32>} : memref<16x128xf32, #tpu.memory_space<vmem>>, vector<16x128xf32>,
    %c0_i32_17 = arith.constant 0 : i32
    %15 = arith.cmpi eq, %arg1, %c0_i32_17 : i32
    %16 = arith.extui %15 : i1 to i32
    %c0_i32_18 = arith.constant 0 : i32
    %17 = arith.cmpi ne, %16, %c0_i32_18 : i32
    scf.if %17 {
      %c0_19 = arith.constant 0 : index
      %c0_20 = arith.constant 0 : index
      %18 = vector.load %arg2[%c0_19, %c0_20] : memref<16x128xbf16, #tpu.memory_space<vmem>>, vector<16x128xbf16>
      %c0_21 = arith.constant 0 : index
      %c0_22 = arith.constant 0 : index
      %19 = vector.load %arg8[%c0_21, %c0_22] : memref<128x128xbf16, #tpu.memory_space<vmem>>, vector<128x128xbf16>
      %cst_23 = arith.constant dense<0.000000e+00> : vector<16x128xf32>
      %20 = tpu.matmul %18, %19, %cst_23 {dimension_numbers = #tpu.dot_dimension_numbers<[1], [0], [0], [1], [0, 0, 1, 1], [], []>} : vector<16x128xbf16>, vector<128x128xbf16>, vector<16x128xf32> -> vector<16x128xf32>
      %c0_24 = arith.constant 0 : index
      %c0_25 = arith.constant 0 : index
      %21 = vector.load %arg13[%c0_24, %c0_25] : memref<16x128xf32, #tpu.memory_space<vmem>>, vector<16x128xf32>
      %c0_26 = arith.constant 0 : index
      %c0_27 = arith.constant 0 : index
      %22 = vector.load %arg7[%c0_26, %c0_27] : memref<16x1xf32, #tpu.memory_space<vmem>>, vector<16x1xf32>
      %23 = vector.broadcast %22 : vector<16x1xf32> to vector<16x128xf32>
      %24 = arith.mulf %21, %23 : vector<16x128xf32>
      %25 = arith.addf %24, %20 : vector<16x128xf32>
      %c0_28 = arith.constant 0 : index
      %c0_29 = arith.constant 0 : index
      %26 = vector.load %arg9[%c0_28, %c0_29] : memref<1x128xf32, #tpu.memory_space<vmem>>, vector<1x128xf32>
      %27 = vector.broadcast %26 : vector<1x128xf32> to vector<16x128xf32>
      %28 = arith.addf %25, %27 : vector<16x128xf32>
      %cst_30 = arith.constant 0.000000e+00 : f32
      %29 = vector.broadcast %cst_30 : f32 to vector<16x128xf32>
      %30 = arith.maximumf %28, %29 : vector<16x128xf32>
      %c0_31 = arith.constant 0 : index
      %c0_32 = arith.constant 0 : index
      %31 = vector.load %arg10[%c0_31, %c0_32] : memref<1x128xf32, #tpu.memory_space<vmem>>, vector<1x128xf32>
      %32 = vector.broadcast %31 : vector<1x128xf32> to vector<16x128xf32>
      %33 = arith.mulf %30, %32 : vector<16x128xf32>
      %c0_33 = arith.constant 0 : index
      %c0_34 = arith.constant 0 : index
      %34 = vector.load %arg11[%c0_33, %c0_34] : memref<1x128xf32, #tpu.memory_space<vmem>>, vector<1x128xf32>
      %35 = vector.broadcast %34 : vector<1x128xf32> to vector<16x128xf32>
      %36 = arith.addf %33, %35 : vector<16x128xf32>
      %37 = arith.truncf %36 : vector<16x128xf32> to vector<16x128xbf16>
      %c0_35 = arith.constant 0 : index
      %c0_36 = arith.constant 0 : index
      %38 = vector.load %arg12[%c0_35, %c0_36] : memref<16x128xbf16, #tpu.memory_space<vmem>>, vector<16x128xbf16>
      tpu.vector_store %arg12[%c0_35, %c0_36], %37 {strides = array<i32>} : memref<16x128xbf16, #tpu.memory_space<vmem>>, vector<16x128xbf16>,
    } else {
    }
    return
  }
  func.func @transform_0(%arg0: i32, %arg1: i32) -> (i32, i32) {
    %c0_i32 = arith.constant 0 : i32
    %c0_i32_0 = arith.constant 0 : i32
    return %arg0, %c0_i32 : i32, i32
  }
  func.func @transform_1(%arg0: i32, %arg1: i32) -> (i32, i32) {
    %c0_i32 = arith.constant 0 : i32
    return %arg0, %arg1 : i32, i32
  }
  func.func @transform_2(%arg0: i32, %arg1: i32) -> (i32, i32) {
    %c0_i32 = arith.constant 0 : i32
    %c0_i32_0 = arith.constant 0 : i32
    return %arg1, %c0_i32 : i32, i32
  }
  func.func @transform_3(%arg0: i32, %arg1: i32) -> (i32, i32) {
    %c0_i32 = arith.constant 0 : i32
    return %arg0, %arg1 : i32, i32
  }
  func.func @transform_4(%arg0: i32, %arg1: i32) -> (i32, i32) {
    %c0_i32 = arith.constant 0 : i32
    %c0_i32_0 = arith.constant 0 : i32
    return %arg1, %c0_i32 : i32, i32
  }
  func.func @transform_5(%arg0: i32, %arg1: i32) -> (i32, i32) {
    %c0_i32 = arith.constant 0 : i32
    %c0_i32_0 = arith.constant 0 : i32
    return %arg0, %c0_i32 : i32, i32
  }
  func.func @transform_6(%arg0: i32, %arg1: i32) -> (i32, i32) {
    %c0_i32 = arith.constant 0 : i32
    %c0_i32_0 = arith.constant 0 : i32
    %c0_i32_1 = arith.constant 0 : i32
    return %c0_i32, %c0_i32_0 : i32, i32
  }
  func.func @transform_7(%arg0: i32, %arg1: i32) -> (i32, i32) {
    %c0_i32 = arith.constant 0 : i32
    %c0_i32_0 = arith.constant 0 : i32
    %c0_i32_1 = arith.constant 0 : i32
    return %c0_i32, %c0_i32_0 : i32, i32
  }
  func.func @transform_8(%arg0: i32, %arg1: i32) -> (i32, i32) {
    %c0_i32 = arith.constant 0 : i32
    %c0_i32_0 = arith.constant 0 : i32
    %c0_i32_1 = arith.constant 0 : i32
    return %c0_i32, %c0_i32_0 : i32, i32
  }
  func.func @transform_9(%arg0: i32, %arg1: i32) -> (i32, i32) {
    %c0_i32 = arith.constant 0 : i32
    %c0_i32_0 = arith.constant 0 : i32
    %c0_i32_1 = arith.constant 0 : i32
    return %c0_i32, %c0_i32_0 : i32, i32
  }
  func.func @transform_10(%arg0: i32, %arg1: i32) -> (i32, i32) {
    %c0_i32 = arith.constant 0 : i32
    %c0_i32_0 = arith.constant 0 : i32
    return %arg0, %c0_i32 : i32, i32
  }
}

</mosaic_0001>

<llo_original>
// kernel: tpu_custom_call.1
$region0: #{tpu_custom_call.1}
  #allocation0 [shape = 'u32[]', space=smem, size = 0x4, offset = 0x4, fixed_abs, tag = 'smem constant byte address 0x4 - core index']
  #allocation1 [shape = 'u32[144,128]{1,0:T(1,128)}', space=vmem, size = 0x12000, scoped, tag = 'internal scratch']
  #allocation2 [shape = 'f32[16,128]{1,0:T(8,128)}', space=vmem, size = 0x2000, scoped, tag = 'scratch operand']
  %s0 = inlined_call_operand.hbm [shape: bf16[16,128], index: 0, kind: input, shape index: {}]
  %s1 = inlined_call_operand.hbm [shape: bf16[16,128], index: 1, kind: input, shape index: {}]
  %s2 = inlined_call_operand.hbm [shape: bf16[128,128], index: 2, kind: input, shape index: {}]
  %s3 = inlined_call_operand.hbm [shape: bf16[16,128], index: 3, kind: input, shape index: {}]
  %s4 = inlined_call_operand.hbm [shape: bf16[128,128], index: 4, kind: input, shape index: {}]
  %s5 = inlined_call_operand.hbm [shape: f32[16,1], index: 5, kind: input, shape index: {}]
  %s6 = inlined_call_operand.hbm [shape: bf16[128,128], index: 6, kind: input, shape index: {}]
  %s7 = inlined_call_operand.hbm [shape: f32[1,128], index: 7, kind: input, shape index: {}]
  %s8 = inlined_call_operand.hbm [shape: f32[1,128], index: 8, kind: input, shape index: {}]
  %s9 = inlined_call_operand.hbm [shape: f32[1,128], index: 9, kind: input, shape index: {}]
  %s10 = inlined_call_operand.hbm [shape: bf16[16,128], index: 10, kind: output, shape index: {}]
  %s11 = sld [smem:[#allocation0]]
  $region98: #{tpu_custom_call.1} parent=0
    _
  %s13 = ssub.s32 1, %s11
  %s14 = scalar_select 0, %s13, %s11
  $region1: #{tpu_custom_call.1} parent=0
    #allocation3 [shape = 'u8[4096]{0}', space=vmem, size = 0x1000, scoped, tag = 'input window, operand 0, single buffered']
    #allocation4 [shape = 's32[1]{0}', space=sflag, size = 0x4, scoped, tag = 'scoped memory for tpu_custom_call.1']
    #allocation5 [shape = 's32[1]{0}', space=sflag, size = 0x4, scoped, tag = 'scoped memory for tpu_custom_call.1']
    #allocation6 [shape = 'u8[4096]{0}', space=vmem, size = 0x1000, scoped, tag = 'input window, operand 1, single buffered']
    #allocation7 [shape = 's32[1]{0}', space=sflag, size = 0x4, scoped, tag = 'scoped memory for tpu_custom_call.1']
    #allocation8 [shape = 'u8[32768]{0}', space=vmem, size = 0x8000, scoped, tag = 'input window, operand 2, single buffered']
    #allocation9 [shape = 'u8[4096]{0}', space=vmem, size = 0x1000, scoped, tag = 'input window, operand 3, single buffered']
    #allocation10 [shape = 's32[1]{0}', space=sflag, size = 0x4, scoped, tag = 'scoped memory for tpu_custom_call.1']
    #allocation11 [shape = 'u8[32768]{0}', space=vmem, size = 0x8000, scoped, tag = 'input window, operand 4, single buffered']
    #allocation12 [shape = 'u8[8192]{0}', space=vmem, size = 0x2000, scoped, tag = 'input window, operand 5, single buffered']
    #allocation13 [shape = 's32[1]{0}', space=sflag, size = 0x4, scoped, tag = 'scoped memory for tpu_custom_call.1']
    #allocation14 [shape = 'u8[32768]{0}', space=vmem, size = 0x8000, scoped, tag = 'input window, operand 6, single buffered']
    #allocation15 [shape = 'u8[512]{0}', space=vmem, size = 0x400, scoped, tag = 'input window, operand 7, single buffered']
    #allocation16 [shape = 's32[1]{0}', space=sflag, size = 0x4, scoped, tag = 'scoped memory for tpu_custom_call.1']
    #allocation17 [shape = 'u8[512]{0}', space=vmem, size = 0x400, scoped, tag = 'input window, operand 8, single buffered']
    #allocation18 [shape = 'u8[512]{0}', space=vmem, size = 0x400, scoped, tag = 'input window, operand 9, single buffered']
    #allocation19 [shape = 's32[1]{0}', space=sflag, size = 0x4, scoped, tag = 'scoped memory for tpu_custom_call.1']
    #allocation20 [shape = 'u8[4096]{0}', space=vmem, size = 0x1000, scoped, tag = 'output window, operand 0, single buffered']
    %15 = vsyncpa [#allocation4], 0
    %16 = vsyncpa [#allocation7], 0
    %17 = vsyncpa [#allocation10], 0
    %18 = vsyncpa [#allocation13], 0
    %19 = vsyncpa [#allocation16], 0
    %20 = vsyncpa [#allocation19], 0
    %21 = vsyncpa [#allocation5], 0
    // Predicated region
    $region2: #{tpu_custom_call.1} parent=1 // pred_check
      _
    $region3: #{tpu_custom_call.1} parent=1 // pred_check_branch
      %23 = sbr.rel (0) target = $region5
    $region4: #{tpu_custom_call.1} parent=1 // pred_region
      %s25 = ssub.s32 128, 128
      %26 = vsyncadd [#allocation4], %s25
      %s27 = sshll.u32 [#allocation3], 4
      %s28 = int_to_ptr.vmem [resolvable:$true] %s27
      %33 = dma.hbm_to_vmem [thread:$0]  %s0, 128, %s28, [#allocation4], 64, 64, 4
    $region5: #{tpu_custom_call.1} parent=1 // pred_fallthru
      _
    // Predicated region
    $region6: #{tpu_custom_call.1} parent=1 // pred_check
      _
    $region7: #{tpu_custom_call.1} parent=1 // pred_check_branch
      %35 = sbr.rel (0) target = $region9
    $region8: #{tpu_custom_call.1} parent=1 // pred_region
      %s37 = ssub.s32 128, 128
      %38 = vsyncadd [#allocation7], %s37
      %s39 = sshll.u32 [#allocation6], 4
      %s40 = int_to_ptr.vmem [resolvable:$true] %s39
      %45 = dma.hbm_to_vmem [thread:$0]  %s1, 128, %s40, [#allocation7], 64, 64, 4
    $region9: #{tpu_custom_call.1} parent=1 // pred_fallthru
      _
    // Predicated region
    $region10: #{tpu_custom_call.1} parent=1 // pred_check
      _
    $region11: #{tpu_custom_call.1} parent=1 // pred_check_branch
      %47 = sbr.rel (0) target = $region13
    $region12: #{tpu_custom_call.1} parent=1 // pred_region
      %s49 = ssub.s32 1024, 1024
      %50 = vsyncadd [#allocation7], %s49
      %s51 = sshll.u32 [#allocation8], 4
      %s52 = int_to_ptr.vmem [resolvable:$true] %s51
      %57 = dma.hbm_to_vmem [thread:$0]  %s2, 1024, %s52, [#allocation7], 64, 64, 4
    $region13: #{tpu_custom_call.1} parent=1 // pred_fallthru
      _
    // Predicated region
    $region14: #{tpu_custom_call.1} parent=1 // pred_check
      _
    $region15: #{tpu_custom_call.1} parent=1 // pred_check_branch
      %59 = sbr.rel (0) target = $region17
    $region16: #{tpu_custom_call.1} parent=1 // pred_region
      %s61 = ssub.s32 128, 128
      %62 = vsyncadd [#allocation10], %s61
      %s63 = sshll.u32 [#allocation9], 4
      %s64 = int_to_ptr.vmem [resolvable:$true] %s63
      %69 = dma.hbm_to_vmem [thread:$0]  %s3, 128, %s64, [#allocation10], 64, 64, 4
    $region17: #{tpu_custom_call.1} parent=1 // pred_fallthru
      _
    // Predicated region
    $region18: #{tpu_custom_call.1} parent=1 // pred_check
      _
    $region19: #{tpu_custom_call.1} parent=1 // pred_check_branch
      %71 = sbr.rel (0) target = $region21
    $region20: #{tpu_custom_call.1} parent=1 // pred_region
      %s73 = ssub.s32 1024, 1024
      %74 = vsyncadd [#allocation10], %s73
      %s75 = sshll.u32 [#allocation11], 4
      %s76 = int_to_ptr.vmem [resolvable:$true] %s75
      %81 = dma.hbm_to_vmem [thread:$0]  %s4, 1024, %s76, [#allocation10], 64, 64, 4
    $region21: #{tpu_custom_call.1} parent=1 // pred_fallthru
      _
    // Predicated region
    $region22: #{tpu_custom_call.1} parent=1 // pred_check
      _
    $region23: #{tpu_custom_call.1} parent=1 // pred_check_branch
      %83 = sbr.rel (0) target = $region25
    $region24: #{tpu_custom_call.1} parent=1 // pred_region
      %s85 = ssub.s32 256, 256
      %86 = vsyncadd [#allocation13], %s85
      %s87 = sshll.u32 [#allocation12], 4
      %s88 = int_to_ptr.vmem [resolvable:$true] %s87
      %93 = dma.hbm_to_vmem [thread:$0]  %s5, 256, %s88, [#allocation13], 128, 128, 8
    $region25: #{tpu_custom_call.1} parent=1 // pred_fallthru
      _
    // Predicated region
    $region26: #{tpu_custom_call.1} parent=1 // pred_check
      _
    $region27: #{tpu_custom_call.1} parent=1 // pred_check_branch
      %95 = sbr.rel (0) target = $region29
    $region28: #{tpu_custom_call.1} parent=1 // pred_region
      %s97 = ssub.s32 1024, 1024
      %98 = vsyncadd [#allocation13], %s97
      %s99 = sshll.u32 [#allocation14], 4
      %s100 = int_to_ptr.vmem [resolvable:$true] %s99
      %105 = dma.hbm_to_vmem [thread:$0]  %s6, 1024, %s100, [#allocation13], 64, 64, 4
    $region29: #{tpu_custom_call.1} parent=1 // pred_fallthru
      _
    // Predicated region
    $region30: #{tpu_custom_call.1} parent=1 // pred_check
      _
    $region31: #{tpu_custom_call.1} parent=1 // pred_check_branch
      %107 = sbr.rel (0) target = $region33
    $region32: #{tpu_custom_call.1} parent=1 // pred_region
      %s109 = ssub.s32 16, 16
      %110 = vsyncadd [#allocation16], %s109
      %s112 = sshll.u32 [#allocation15], 4
      %s113 = int_to_ptr.vmem [resolvable:$true] %s112
      %115 = dma.hbm_to_vmem [thread:$0]  %s7, 16, %s113, [#allocation16]
    $region33: #{tpu_custom_call.1} parent=1 // pred_fallthru
      _
    // Predicated region
    $region34: #{tpu_custom_call.1} parent=1 // pred_check
      _
    $region35: #{tpu_custom_call.1} parent=1 // pred_check_branch
      %117 = sbr.rel (0) target = $region37
    $region36: #{tpu_custom_call.1} parent=1 // pred_region
      %s119 = ssub.s32 16, 16
      %120 = vsyncadd [#allocation16], %s119
      %s122 = sshll.u32 [#allocation17], 4
      %s123 = int_to_ptr.vmem [resolvable:$true] %s122
      %125 = dma.hbm_to_vmem [thread:$0]  %s8, 16, %s123, [#allocation16]
    $region37: #{tpu_custom_call.1} parent=1 // pred_fallthru
      _
    // Predicated region
    $region38: #{tpu_custom_call.1} parent=1 // pred_check
      _
    $region39: #{tpu_custom_call.1} parent=1 // pred_check_branch
      %127 = sbr.rel (0) target = $region41
    $region40: #{tpu_custom_call.1} parent=1 // pred_region
      %s129 = ssub.s32 16, 16
      %130 = vsyncadd [#allocation19], %s129
      %s132 = sshll.u32 [#allocation18], 4
      %s133 = int_to_ptr.vmem [resolvable:$true] %s132
      %135 = dma.hbm_to_vmem [thread:$0]  %s9, 16, %s133, [#allocation19]
    $region41: #{tpu_custom_call.1} parent=1 // pred_fallthru
      _
    // Predicated region
    $region42: #{tpu_custom_call.1} parent=1 // pred_check
      _
    $region43: #{tpu_custom_call.1} parent=1 // pred_check_branch
      %137 = sbr.rel (0) target = $region45
    $region44: #{tpu_custom_call.1} parent=1 // pred_region
      %138 = dma.done [#allocation4], 128
    $region45: #{tpu_custom_call.1} parent=1 // pred_fallthru
      _
    // Predicated region
    $region46: #{tpu_custom_call.1} parent=1 // pred_check
      _
    $region47: #{tpu_custom_call.1} parent=1 // pred_check_branch
      %140 = sbr.rel (0) target = $region49
    $region48: #{tpu_custom_call.1} parent=1 // pred_region
      %141 = dma.done [#allocation7], 128
    $region49: #{tpu_custom_call.1} parent=1 // pred_fallthru
      _
    // Predicated region
    $region50: #{tpu_custom_call.1} parent=1 // pred_check
      _
    $region51: #{tpu_custom_call.1} parent=1 // pred_check_branch
      %143 = sbr.rel (0) target = $region53
    $region52: #{tpu_custom_call.1} parent=1 // pred_region
      %144 = dma.done [#allocation7], 1024
    $region53: #{tpu_custom_call.1} parent=1 // pred_fallthru
      _
    // Predicated region
    $region54: #{tpu_custom_call.1} parent=1 // pred_check
      _
    $region55: #{tpu_custom_call.1} parent=1 // pred_check_branch
      %146 = sbr.rel (0) target = $region57
    $region56: #{tpu_custom_call.1} parent=1 // pred_region
      %147 = dma.done [#allocation10], 128
    $region57: #{tpu_custom_call.1} parent=1 // pred_fallthru
      _
    // Predicated region
    $region58: #{tpu_custom_call.1} parent=1 // pred_check
      _
    $region59: #{tpu_custom_call.1} parent=1 // pred_check_branch
      %149 = sbr.rel (0) target = $region61
    $region60: #{tpu_custom_call.1} parent=1 // pred_region
      %150 = dma.done [#allocation10], 1024
    $region61: #{tpu_custom_call.1} parent=1 // pred_fallthru
      _
    // Predicated region
    $region62: #{tpu_custom_call.1} parent=1 // pred_check
      _
    $region63: #{tpu_custom_call.1} parent=1 // pred_check_branch
      %152 = sbr.rel (0) target = $region65
    $region64: #{tpu_custom_call.1} parent=1 // pred_region
      %153 = dma.done [#allocation13], 256
    $region65: #{tpu_custom_call.1} parent=1 // pred_fallthru
      _
    // Predicated region
    $region66: #{tpu_custom_call.1} parent=1 // pred_check
      _
    $region67: #{tpu_custom_call.1} parent=1 // pred_check_branch
      %155 = sbr.rel (0) target = $region69
    $region68: #{tpu_custom_call.1} parent=1 // pred_region
      %156 = dma.done [#allocation13], 1024
    $region69: #{tpu_custom_call.1} parent=1 // pred_fallthru
      _
    // Predicated region
    $region70: #{tpu_custom_call.1} parent=1 // pred_check
      _
    $region71: #{tpu_custom_call.1} parent=1 // pred_check_branch
      %158 = sbr.rel (0) target = $region73
    $region72: #{tpu_custom_call.1} parent=1 // pred_region
      %159 = dma.done [#allocation16], 16
    $region73: #{tpu_custom_call.1} parent=1 // pred_fallthru
      _
    // Predicated region
    $region74: #{tpu_custom_call.1} parent=1 // pred_check
      _
    $region75: #{tpu_custom_call.1} parent=1 // pred_check_branch
      %161 = sbr.rel (0) target = $region77
    $region76: #{tpu_custom_call.1} parent=1 // pred_region
      %162 = dma.done [#allocation16], 16
    $region77: #{tpu_custom_call.1} parent=1 // pred_fallthru
      _
    // Predicated region
    $region78: #{tpu_custom_call.1} parent=1 // pred_check
      _
    $region79: #{tpu_custom_call.1} parent=1 // pred_check_branch
      %164 = sbr.rel (0) target = $region81
    $region80: #{tpu_custom_call.1} parent=1 // pred_region
      %165 = dma.done [#allocation19], 16
    $region81: #{tpu_custom_call.1} parent=1 // pred_fallthru
      _
    %p167 = scmp.eq.s32.totalorder 0, 0
    // Predicated region
    $region82: #{tpu_custom_call.1} parent=1 // pred_check
      %p168 = pneg %p167
    $region83: #{tpu_custom_call.1} parent=1 // pred_check_branch
      %170 = sbr.rel (%p168) target = $region85
    $region84: #{tpu_custom_call.1} parent=1 // pred_region
      %171 = vst [vmem:[#allocation2] sm:$0xff] 0.0
      %172 = vst [vmem:[#allocation2 + $0x8] sm:$0xff] 0.0
    $region85: #{tpu_custom_call.1} parent=1 // pred_fallthru
      _
    %v173 = vld [vmem:[#allocation2] sm:$0xff]
    %v174 = vld [vmem:[#allocation2 + $0x8] sm:$0xff]
    %v175 = vld [vmem:[#allocation6] sm:$0xf]
    %v176 = vld [vmem:[#allocation6 + $0x4] sm:$0xf]
    %v177 = vld [vmem:[#allocation8] sm:$0xf]
    %v178 = vld [vmem:[#allocation8 + $0x4] sm:$0xf]
    %v179 = vld [vmem:[#allocation8 + $0x8] sm:$0xf]
    %v180 = vld [vmem:[#allocation8 + $0xc] sm:$0xf]
    %v181 = vld [vmem:[#allocation8 + $0x10] sm:$0xf]
    %v182 = vld [vmem:[#allocation8 + $0x14] sm:$0xf]
    %v183 = vld [vmem:[#allocation8 + $0x18] sm:$0xf]
    %v184 = vld [vmem:[#allocation8 + $0x1c] sm:$0xf]
    %v185 = vld [vmem:[#allocation8 + $0x20] sm:$0xf]
    %v186 = vld [vmem:[#allocation8 + $0x24] sm:$0xf]
    %v187 = vld [vmem:[#allocation8 + $0x28] sm:$0xf]
    %v188 = vld [vmem:[#allocation8 + $0x2c] sm:$0xf]
    %v189 = vld [vmem:[#allocation8 + $0x30] sm:$0xf]
    %v190 = vld [vmem:[#allocation8 + $0x34] sm:$0xf]
    %v191 = vld [vmem:[#allocation8 + $0x38] sm:$0xf]
    %v192 = vld [vmem:[#allocation8 + $0x3c] sm:$0xf]
    %v195 = vunpack.c.l.b16 %v175
    %v196 = vunpack.c.l.b16 %v176
    %v197 = vpack.c.b16 %v196, %v195
    %v215 = vunpack.c.l.b16 %v177
    %v216 = vunpack.c.l.b16 %v178
    %v217 = vunpack.c.l.b16 %v179
    %v218 = vunpack.c.l.b16 %v180
    %v219 = vunpack.c.l.b16 %v181
    %v220 = vunpack.c.l.b16 %v182
    %v221 = vunpack.c.l.b16 %v183
    %v222 = vunpack.c.l.b16 %v184
    %v223 = vunpack.c.l.b16 %v185
    %v224 = vunpack.c.l.b16 %v186
    %v225 = vunpack.c.l.b16 %v187
    %v226 = vunpack.c.l.b16 %v188
    %v227 = vunpack.c.l.b16 %v189
    %v228 = vunpack.c.l.b16 %v190
    %v229 = vunpack.c.l.b16 %v191
    %v230 = vunpack.c.l.b16 %v192
    %v231 = vpack.c.b16 %v216, %v215
    %v232 = vpack.c.b16 %v218, %v217
    %v233 = vpack.c.b16 %v220, %v219
    %v234 = vpack.c.b16 %v222, %v221
    %v235 = vpack.c.b16 %v224, %v223
    %v236 = vpack.c.b16 %v226, %v225
    %v237 = vpack.c.b16 %v228, %v227
    %v238 = vpack.c.b16 %v230, %v229
    %247 = vmatprep.subr.bf16.mxu0 0
    %248 = vmatpush1.bf16.msra.mxu0 %v231
    %249 = vmatprep.subr.bf16.mxu0 0
    %250 = vmatpush1.bf16.msra.mxu0 %v232
    %251 = vmatprep.subr.bf16.mxu0 0
    %252 = vmatpush1.bf16.msra.mxu0 %v233
    %253 = vmatprep.subr.bf16.mxu0 0
    %254 = vmatpush1.bf16.msra.mxu0 %v234
    %255 = vmatprep.subr.bf16.mxu0 0
    %256 = vmatpush1.bf16.msra.mxu0 %v235
    %257 = vmatprep.subr.bf16.mxu0 0
    %258 = vmatpush1.bf16.msra.mxu0 %v236
    %259 = vmatprep.subr.bf16.mxu0 0
    %260 = vmatpush1.bf16.msra.mxu0 %v237
    %261 = vmatprep.subr.bf16.mxu0 0
    %262 = vmatpush1.bf16.msra.mxu0 %v238
    %263 = vmatprep.subr.bf16.mxu0 0
    %264 = vmatpush1.bf16.msra.mxu0 0
    %265 = vmatprep.subr.bf16.mxu0 0
    %266 = vmatpush1.bf16.msra.mxu0 0
    %267 = vmatprep.subr.bf16.mxu0 0
    %268 = vmatpush1.bf16.msra.mxu0 0
    %269 = vmatprep.subr.bf16.mxu0 0
    %270 = vmatpush1.bf16.msra.mxu0 0
    %271 = vmatprep.subr.bf16.mxu0 0
    %272 = vmatpush1.bf16.msra.mxu0 0
    %273 = vmatprep.subr.bf16.mxu0 0
    %274 = vmatpush1.bf16.msra.mxu0 0
    %275 = vmatprep.subr.bf16.mxu0 0
    %276 = vmatpush1.bf16.msra.mxu0 0
    %277 = vmatprep.subr.bf16.mxu0 0
    %278 = vmatpush1.bf16.msra.mxu0 0
    %279 = vmatprep.mubr.bf16.mxu0 0
    %280 = vmatmul.mubr.bf16.gmra.mrb[0].mxu0 %v197
    %v281 = vpop.f32.mrb[0].mxu0
    %v282 = vadd.f32 0.0, %v281
    %v283 = vpop.f32.mrb[0].mxu0
    %v284 = vpop.f32.mrb[0].mxu0
    %v285 = vadd.f32 0.0, %v284
    %v286 = vpop.f32.mrb[0].mxu0
    %287 = vdwg.mxu0
    %v288 = vadd.f32 %v173, %v282
    %v289 = vadd.f32 %v174, %v285
    %290 = vst [vmem:[#allocation2] sm:$0xff] %v288
    %291 = vst [vmem:[#allocation2 + $0x8] sm:$0xff] %v289
    %v292 = vld [vmem:[#allocation2] sm:$0xff]
    %v293 = vld [vmem:[#allocation2 + $0x8] sm:$0xff]
    %v294 = vld [vmem:[#allocation9] sm:$0xf]
    %v295 = vld [vmem:[#allocation9 + $0x4] sm:$0xf]
    %v296 = vld [vmem:[#allocation11] sm:$0xf]
    %v297 = vld [vmem:[#allocation11 + $0x4] sm:$0xf]
    %v298 = vld [vmem:[#allocation11 + $0x8] sm:$0xf]
    %v299 = vld [vmem:[#allocation11 + $0xc] sm:$0xf]
    %v300 = vld [vmem:[#allocation11 + $0x10] sm:$0xf]
    %v301 = vld [vmem:[#allocation11 + $0x14] sm:$0xf]
    %v302 = vld [vmem:[#allocation11 + $0x18] sm:$0xf]
    %v303 = vld [vmem:[#allocation11 + $0x1c] sm:$0xf]
    %v304 = vld [vmem:[#allocation11 + $0x20] sm:$0xf]
    %v305 = vld [vmem:[#allocation11 + $0x24] sm:$0xf]
    %v306 = vld [vmem:[#allocation11 + $0x28] sm:$0xf]
    %v307 = vld [vmem:[#allocation11 + $0x2c] sm:$0xf]
    %v308 = vld [vmem:[#allocation11 + $0x30] sm:$0xf]
    %v309 = vld [vmem:[#allocation11 + $0x34] sm:$0xf]
    %v310 = vld [vmem:[#allocation11 + $0x38] sm:$0xf]
    %v311 = vld [vmem:[#allocation11 + $0x3c] sm:$0xf]
    %v314 = vunpack.c.l.b16 %v294
    %v315 = vunpack.c.l.b16 %v295
    %v316 = vpack.c.b16 %v315, %v314
    %v334 = vunpack.c.l.b16 %v296
    %v335 = vunpack.c.l.b16 %v297
    %v336 = vunpack.c.l.b16 %v298
    %v337 = vunpack.c.l.b16 %v299
    %v338 = vunpack.c.l.b16 %v300
    %v339 = vunpack.c.l.b16 %v301
    %v340 = vunpack.c.l.b16 %v302
    %v341 = vunpack.c.l.b16 %v303
    %v342 = vunpack.c.l.b16 %v304
    %v343 = vunpack.c.l.b16 %v305
    %v344 = vunpack.c.l.b16 %v306
    %v345 = vunpack.c.l.b16 %v307
    %v346 = vunpack.c.l.b16 %v308
    %v347 = vunpack.c.l.b16 %v309
    %v348 = vunpack.c.l.b16 %v310
    %v349 = vunpack.c.l.b16 %v311
    %v350 = vpack.c.b16 %v335, %v334
    %v351 = vpack.c.b16 %v337, %v336
    %v352 = vpack.c.b16 %v339, %v338
    %v353 = vpack.c.b16 %v341, %v340
    %v354 = vpack.c.b16 %v343, %v342
    %v355 = vpack.c.b16 %v345, %v344
    %v356 = vpack.c.b16 %v347, %v346
    %v357 = vpack.c.b16 %v349, %v348
    %366 = vmatprep.subr.bf16.mxu0 0
    %367 = vmatpush1.bf16.msra.mxu0 %v350
    %368 = vmatprep.subr.bf16.mxu0 0
    %369 = vmatpush1.bf16.msra.mxu0 %v351
    %370 = vmatprep.subr.bf16.mxu0 0
    %371 = vmatpush1.bf16.msra.mxu0 %v352
    %372 = vmatprep.subr.bf16.mxu0 0
    %373 = vmatpush1.bf16.msra.mxu0 %v353
    %374 = vmatprep.subr.bf16.mxu0 0
    %375 = vmatpush1.bf16.msra.mxu0 %v354
    %376 = vmatprep.subr.bf16.mxu0 0
    %377 = vmatpush1.bf16.msra.mxu0 %v355
    %378 = vmatprep.subr.bf16.mxu0 0
    %379 = vmatpush1.bf16.msra.mxu0 %v356
    %380 = vmatprep.subr.bf16.mxu0 0
    %381 = vmatpush1.bf16.msra.mxu0 %v357
    %382 = vmatprep.subr.bf16.mxu0 0
    %383 = vmatpush1.bf16.msra.mxu0 0
    %384 = vmatprep.subr.bf16.mxu0 0
    %385 = vmatpush1.bf16.msra.mxu0 0
    %386 = vmatprep.subr.bf16.mxu0 0
    %387 = vmatpush1.bf16.msra.mxu0 0
    %388 = vmatprep.subr.bf16.mxu0 0
    %389 = vmatpush1.bf16.msra.mxu0 0
    %390 = vmatprep.subr.bf16.mxu0 0
    %391 = vmatpush1.bf16.msra.mxu0 0
    %392 = vmatprep.subr.bf16.mxu0 0
    %393 = vmatpush1.bf16.msra.mxu0 0
    %394 = vmatprep.subr.bf16.mxu0 0
    %395 = vmatpush1.bf16.msra.mxu0 0
    %396 = vmatprep.subr.bf16.mxu0 0
    %397 = vmatpush1.bf16.msra.mxu0 0
    %398 = vmatprep.mubr.bf16.mxu0 0
    %399 = vmatmul.mubr.bf16.gmra.mrb[0].mxu0 %v316
    %v400 = vpop.f32.mrb[0].mxu0
    %v401 = vadd.f32 0.0, %v400
    %v402 = vpop.f32.mrb[0].mxu0
    %v403 = vpop.f32.mrb[0].mxu0
    %v404 = vadd.f32 0.0, %v403
    %v405 = vpop.f32.mrb[0].mxu0
    %406 = vdwg.mxu0
    %v407 = vadd.f32 %v292, %v401
    %v408 = vadd.f32 %v293, %v404
    %409 = vst [vmem:[#allocation2] sm:$0xff] %v407
    %410 = vst [vmem:[#allocation2 + $0x8] sm:$0xff] %v408
    // Predicated region
    $region86: #{tpu_custom_call.1} parent=1 // pred_check
      %p411 = pneg %p167
    $region87: #{tpu_custom_call.1} parent=1 // pred_check_branch
      %413 = sbr.rel (%p411) target = $region89
    $region88: #{tpu_custom_call.1} parent=1 // pred_region
      %v414 = vld [vmem:[#allocation3] sm:$0xf]
      %v415 = vld [vmem:[#allocation3 + $0x4] sm:$0xf]
      %v416 = vld [vmem:[#allocation14] sm:$0xf]
      %v417 = vld [vmem:[#allocation14 + $0x4] sm:$0xf]
      %v418 = vld [vmem:[#allocation14 + $0x8] sm:$0xf]
      %v419 = vld [vmem:[#allocation14 + $0xc] sm:$0xf]
      %v420 = vld [vmem:[#allocation14 + $0x10] sm:$0xf]
      %v421 = vld [vmem:[#allocation14 + $0x14] sm:$0xf]
      %v422 = vld [vmem:[#allocation14 + $0x18] sm:$0xf]
      %v423 = vld [vmem:[#allocation14 + $0x1c] sm:$0xf]
      %v424 = vld [vmem:[#allocation14 + $0x20] sm:$0xf]
      %v425 = vld [vmem:[#allocation14 + $0x24] sm:$0xf]
      %v426 = vld [vmem:[#allocation14 + $0x28] sm:$0xf]
      %v427 = vld [vmem:[#allocation14 + $0x2c] sm:$0xf]
      %v428 = vld [vmem:[#allocation14 + $0x30] sm:$0xf]
      %v429 = vld [vmem:[#allocation14 + $0x34] sm:$0xf]
      %v430 = vld [vmem:[#allocation14 + $0x38] sm:$0xf]
      %v431 = vld [vmem:[#allocation14 + $0x3c] sm:$0xf]
      %v434 = vunpack.c.l.b16 %v414
      %v435 = vunpack.c.l.b16 %v415
      %v436 = vpack.c.b16 %v435, %v434
      %v454 = vunpack.c.l.b16 %v416
      %v455 = vunpack.c.l.b16 %v417
      %v456 = vunpack.c.l.b16 %v418
      %v457 = vunpack.c.l.b16 %v419
      %v458 = vunpack.c.l.b16 %v420
      %v459 = vunpack.c.l.b16 %v421
      %v460 = vunpack.c.l.b16 %v422
      %v461 = vunpack.c.l.b16 %v423
      %v462 = vunpack.c.l.b16 %v424
      %v463 = vunpack.c.l.b16 %v425
      %v464 = vunpack.c.l.b16 %v426
      %v465 = vunpack.c.l.b16 %v427
      %v466 = vunpack.c.l.b16 %v428
      %v467 = vunpack.c.l.b16 %v429
      %v468 = vunpack.c.l.b16 %v430
      %v469 = vunpack.c.l.b16 %v431
      %v470 = vpack.c.b16 %v455, %v454
      %v471 = vpack.c.b16 %v457, %v456
      %v472 = vpack.c.b16 %v459, %v458
      %v473 = vpack.c.b16 %v461, %v460
      %v474 = vpack.c.b16 %v463, %v462
      %v475 = vpack.c.b16 %v465, %v464
      %v476 = vpack.c.b16 %v467, %v466
      %v477 = vpack.c.b16 %v469, %v468
      %486 = vmatprep.subr.bf16.mxu0 0
      %487 = vmatpush1.bf16.msra.mxu0 %v470
      %488 = vmatprep.subr.bf16.mxu0 0
      %489 = vmatpush1.bf16.msra.mxu0 %v471
      %490 = vmatprep.subr.bf16.mxu0 0
      %491 = vmatpush1.bf16.msra.mxu0 %v472
      %492 = vmatprep.subr.bf16.mxu0 0
      %493 = vmatpush1.bf16.msra.mxu0 %v473
      %494 = vmatprep.subr.bf16.mxu0 0
      %495 = vmatpush1.bf16.msra.mxu0 %v474
      %496 = vmatprep.subr.bf16.mxu0 0
      %497 = vmatpush1.bf16.msra.mxu0 %v475
      %498 = vmatprep.subr.bf16.mxu0 0
      %499 = vmatpush1.bf16.msra.mxu0 %v476
      %500 = vmatprep.subr.bf16.mxu0 0
      %501 = vmatpush1.bf16.msra.mxu0 %v477
      %502 = vmatprep.subr.bf16.mxu0 0
      %503 = vmatpush1.bf16.msra.mxu0 0
      %504 = vmatprep.subr.bf16.mxu0 0
      %505 = vmatpush1.bf16.msra.mxu0 0
      %506 = vmatprep.subr.bf16.mxu0 0
      %507 = vmatpush1.bf16.msra.mxu0 0
      %508 = vmatprep.subr.bf16.mxu0 0
      %509 = vmatpush1.bf16.msra.mxu0 0
      %510 = vmatprep.subr.bf16.mxu0 0
      %511 = vmatpush1.bf16.msra.mxu0 0
      %512 = vmatprep.subr.bf16.mxu0 0
      %513 = vmatpush1.bf16.msra.mxu0 0
      %514 = vmatprep.subr.bf16.mxu0 0
      %515 = vmatpush1.bf16.msra.mxu0 0
      %516 = vmatprep.subr.bf16.mxu0 0
      %517 = vmatpush1.bf16.msra.mxu0 0
      %518 = vmatprep.mubr.bf16.mxu0 0
      %519 = vmatmul.mubr.bf16.gmra.mrb[0].mxu0 %v436
      %v520 = vpop.f32.mrb[0].mxu0
      %v521 = vadd.f32 0.0, %v520
      %v522 = vpop.f32.mrb[0].mxu0
      %v523 = vpop.f32.mrb[0].mxu0
      %v524 = vadd.f32 0.0, %v523
      %v525 = vpop.f32.mrb[0].mxu0
      %526 = vdwg.mxu0
      %v527 = vld [vmem:[#allocation2] sm:$0xff]
      %v528 = vld [vmem:[#allocation2 + $0x8] sm:$0xff]
      %v529 = vld [vmem:[#allocation12] sm:$0xff]
      %v530 = vld [vmem:[#allocation12 + $0x8] sm:$0xff]
      %532 = vset.pattern.permute.xlu0 0
      %533 = vperm.xlu0 %532, %v529
      %v534 = vpop.permute.xlu0 %533
      %537 = vset.pattern.permute.xlu0 0
      %538 = vperm.xlu0 %537, %v530
      %v539 = vpop.permute.xlu0 %538
      %v541 = vmul.f32 %v527, %v534
      %v542 = vmul.f32 %v528, %v539
      %v543 = vadd.f32 %v541, %v521
      %v544 = vadd.f32 %v542, %v524
      %v545 = vld [vmem:[#allocation15] sm:$0x1]
      %v547 = vlaneseq
      %v548 = vshrl.u32 %v547, 7
      %v549 = vsub.s32 0, %v548
      %v550 = vrot.slane %v545, %v549
      %v552 = vadd.f32 %v543, %v550
      %v553 = vadd.f32 %v544, %v550
      %v554 = vmax.f32 %v552, 0.0
      %v555 = vmax.f32 %v553, 0.0
      %v556 = vld [vmem:[#allocation17] sm:$0x1]
      %v558 = vlaneseq
      %v559 = vshrl.u32 %v558, 7
      %v560 = vsub.s32 0, %v559
      %v561 = vrot.slane %v556, %v560
      %v563 = vmul.f32 %v554, %v561
      %v564 = vmul.f32 %v555, %v561
      %v565 = vld [vmem:[#allocation18] sm:$0x1]
      %v567 = vlaneseq
      %v568 = vshrl.u32 %v567, 7
      %v569 = vsub.s32 0, %v568
      %v570 = vrot.slane %v565, %v569
      %v572 = vadd.f32 %v563, %v570
      %v573 = vadd.f32 %v564, %v570
      %v574 = vpack.c.bf16 %v573, %v572
      %v576 = vunpack.c.l.b16 %v574
      %v577 = vunpack.c.h.b16 %v574
      %v578 = vpack.c.b16 %v576, %v576
      %v579 = vpack.c.b16 %v577, %v577
      %582 = vst [vmem:[#allocation20] sm:$0xf] %v578
      %583 = vst [vmem:[#allocation20 + $0x4] sm:$0xf] %v579
    $region89: #{tpu_custom_call.1} parent=1 // pred_fallthru
      _
    // Predicated region
    $region90: #{tpu_custom_call.1} parent=1 // pred_check
      _
    $region91: #{tpu_custom_call.1} parent=1 // pred_check_branch
      %585 = sbr.rel (0) target = $region93
    $region92: #{tpu_custom_call.1} parent=1 // pred_region
      %s587 = ssub.s32 128, 128
      %588 = vsyncadd [#allocation5], %s587
      %s589 = sshll.u32 [#allocation20], 4
      %s590 = int_to_ptr.vmem [resolvable:$true] %s589
      %595 = dma.vmem_to_hbm [thread:$0]  %s590, 128, %s10, [#allocation5], 64, 64, 4
    $region93: #{tpu_custom_call.1} parent=1 // pred_fallthru
      _
    // Predicated region
    $region94: #{tpu_custom_call.1} parent=1 // pred_check
      _
    $region95: #{tpu_custom_call.1} parent=1 // pred_check_branch
      %597 = sbr.rel (0) target = $region97
    $region96: #{tpu_custom_call.1} parent=1 // pred_region
      %598 = dma.done [#allocation5], 128
    $region97: #{tpu_custom_call.1} parent=1 // pred_fallthru
      _
    %599 = vsyncpa [#allocation4], 1
    %600 = vsyncpa [#allocation7], 1
    %601 = vsyncpa [#allocation10], 1
    %602 = vsyncpa [#allocation13], 1
    %603 = vsyncpa [#allocation16], 1
    %604 = vsyncpa [#allocation19], 1
    %605 = vsyncpa [#allocation5], 1

</llo_original>
